<compile_context>
chip_gen: v7x
topology: tpu7x:2x2x1
jax: 0.10.0
libtpu: 0.0.40
codegen_flags: <defaults>
</compile_context>

<pallas_src>
import jax
import jax.numpy as jnp
from jax.experimental import pallas as pl
from jax.experimental.pallas import tpu as pltpu


# ----------------------------------------------------------------------------
# Generation-aware configuration
# ----------------------------------------------------------------------------
def _tpu_generation() -> int:
    """Best-effort TPU generation (5/6/7/...) from device_kind; 0 if unknown."""
    try:
        kind = jax.devices()[0].device_kind.lower()
    except Exception:
        return 0
    for gen in (7, 6, 5, 4):
        if f"v{gen}" in kind:
            return gen
    return 0


_GEN = _tpu_generation()

# Tiny-input threshold: fused XLA elementwise wins below this (wider on v7x).
_MIN_PALLAS_ELEMS = (128 * 1024) if _GEN >= 7 else (16 * 1024)

# Per-block byte budget (double-buffered in + out => ~4x resident in VMEM).
#   v6e: 4 MiB blocks (16 MiB resident, explicit limit set below).
#   v5e: 2 MiB (16 MiB scoped default).  v7x: 2 MiB (64 MiB physical VMEM).
_BLOCK_BYTES = (4 * 1024 * 1024) if _GEN == 6 else (2 * 1024 * 1024)
_VMEM_LIMIT_BYTES = (48 * 1024 * 1024) if _GEN == 6 else None

# Target at least 2 grid steps per TensorCore (v7x has 2 TCs on the 1-D grid).
_MIN_GRID_STEPS = 4 if _GEN >= 7 else 2

# v6e/v7x have bf16 VPU/EUP -> compute natively in bf16; v5e needs f32.
_NATIVE_BF16 = _GEN >= 6


# ----------------------------------------------------------------------------
# Kernels (static config baked in at trace time)
# ----------------------------------------------------------------------------
def _make_kernel(scale_tanh: bool, binary01: bool, compute_dtype):
    if scale_tanh:
        def kernel(scale_ref, x_ref, o_ref):
            x = x_ref[...].astype(compute_dtype)
            x = x * scale_ref[0].astype(compute_dtype)
            t = jnp.tanh(x)
            if binary01:
                t = 0.5 * (t + 1.0)          # weak-typed: stays in compute_dtype
            o_ref[...] = t.astype(o_ref.dtype)
        return kernel

    def kernel(x_ref, o_ref):
        x = x_ref[...].astype(compute_dtype)
        t = jnp.tanh(x)
        if binary01:
            t = 0.5 * (t + 1.0)
        o_ref[...] = t.astype(o_ref.dtype)
    return kernel


# ----------------------------------------------------------------------------
# Pallas driver for the elementwise pass
# ----------------------------------------------------------------------------
def _pick_lane_width(n_elems: int):
    for w in (4096, 2048, 1024, 512, 256, 128):
        if n_elems % w == 0:
            return w
    return None


def _latent_elementwise(feat, scale, *, scale_tanh, binary01):
    orig_shape = feat.shape
    dtype = feat.dtype
    n = feat.size
    itemsize = dtype.itemsize

    # Sublane granularity: 8 rows for 4-byte, 16 for 2-byte dtypes.
    sublane = 8 * max(1, 4 // itemsize)

    # --- Lane-dense layout plumbing ----------------------------------------
    flat = feat.reshape(-1)
    w = _pick_lane_width(n)
    pad = 0
    if w is None:
        # n not a multiple of 128: pad to a multiple of sublane*512 so the
        # last dim is a big multiple of 128 (unmasked vst) and rows are
        # sublane-aligned.  Pure layout plumbing; sliced off below.
        w = 512
        chunk = sublane * w
        pad = (-n) % chunk
        flat = jnp.pad(flat, (0, pad))
    rows = flat.size // w
    x2d = flat.reshape(rows, w)

    # --- Tile choice ---------------------------------------------------------
    tile_m = max(sublane, (_BLOCK_BYTES // (w * itemsize)) // sublane * sublane)
    tile_m = min(tile_m, rows)
    # Keep enough grid steps for per-core double-buffering (>=2/TC on v7x).
    if rows >= _MIN_GRID_STEPS * sublane and pl.cdiv(rows, tile_m) < _MIN_GRID_STEPS:
        tile_m = max(sublane, (rows // _MIN_GRID_STEPS) // sublane * sublane)
    grid = (pl.cdiv(rows, tile_m),)

    # --- Compute dtype -------------------------------------------------------
    if dtype == jnp.bfloat16 and _NATIVE_BF16:
        compute_dtype = jnp.bfloat16
    else:
        compute_dtype = jnp.float32

    kernel = _make_kernel(scale_tanh, binary01, compute_dtype)

    cost = pl.CostEstimate(
        flops=2 * n,                        # scale-mul + affine
        transcendentals=n,                  # tanh
        bytes_accessed=2 * n * itemsize,    # 1 read + 1 write
    )

    cp_kwargs = dict(dimension_semantics=("parallel",))
    if _VMEM_LIMIT_BYTES is not None:
        cp_kwargs["vmem_limit_bytes"] = _VMEM_LIMIT_BYTES

    data_spec = pl.BlockSpec((tile_m, w), lambda i: (i, 0))
    if scale_tanh:
        in_specs = [pl.BlockSpec(memory_space=pltpu.SMEM), data_spec]
        args = (scale.astype(jnp.float32).reshape(1), x2d)
    else:
        in_specs = [data_spec]
        args = (x2d,)

    out2d = pl.pallas_call(
        kernel,
        out_shape=jax.ShapeDtypeStruct((rows, w), dtype),
        grid_spec=pltpu.PrefetchScalarGridSpec(
            num_scalar_prefetch=0,
            grid=grid,
            in_specs=in_specs,
            out_specs=data_spec,
        ),
        compiler_params=pltpu.CompilerParams(**cp_kwargs),
        cost_estimate=cost,
    )(*args)

    out_flat = out2d.reshape(-1)
    if pad:
        out_flat = out_flat[:n]
    return out_flat.reshape(orig_shape)


# ----------------------------------------------------------------------------
# Wrapper (forward-pass semantics of LatentCode.forward)
# ----------------------------------------------------------------------------
def latent_code_forward(
    x: jax.Array,
    scale: jax.Array,
    *,
    dim: int,
    without_binary: bool = False,
    scale_tanh: bool = True,
    binary01: bool = False,
):
    """Forward pass of LatentCode.

    x     : feature produced by `feat` (identity feat here).
    scale : (1,) scale buffer (registered buffer `self.scale`).
    """
    # TODO(synk): `feat()` is abstract in the base class; treated as identity here.
    feat = x

    if without_binary:
        return feat

    if feat.size < _MIN_PALLAS_ELEMS:
        # Tiny input: pallas_call launch + DMA setup dwarfs one vreg of work.
        f = feat.astype(jnp.float32)
        if scale_tanh:
            f = f * scale.astype(jnp.float32)[0]
        t = jnp.tanh(f)
        out = (0.5 * (t + 1.0)) if binary01 else t
        out = out.astype(feat.dtype)
    else:
        out = _latent_elementwise(feat, scale, scale_tanh=scale_tanh, binary01=binary01)

    if binary01:
        return out
    # torch.tanh(x).view(-1, dim)
    return out.reshape(-1, dim)


# ----------------------------------------------------------------------------
# Reference (plain JAX) for sanity checking
# ----------------------------------------------------------------------------
def _reference(x, scale, *, dim, without_binary, scale_tanh, binary01):
    feat = x
    if without_binary:
        return feat
    f = feat.astype(jnp.float32)
    if scale_tanh:
        f = f * scale.astype(jnp.float32)[0]
    t = jnp.tanh(f)
    if binary01:
        return (0.5 * (t + 1.0)).astype(feat.dtype)
    return t.astype(feat.dtype).reshape(-1, dim)


# ----------------------------------------------------------------------------
# Main
# ----------------------------------------------------------------------------
if __name__ == "__main__":
    key = jax.random.PRNGKey(0)
    # Deterministic buffer init: scale = ones(1), then set_scale(2.5) emulated.
    scale = jnp.ones((1,), dtype=jnp.float32) * 2.5

    cases = [
        # (batch, dim, dtype)
        (512, 256, jnp.float32),    # lane-dense Pallas path (>= 128K elems)
        (512, 256, jnp.bfloat16),   # lane-dense path, native bf16 on v6e/v7x
        (1025, 132, jnp.float32),   # non-128-multiple -> padded lane-dense path
        (8, 128, jnp.float32),      # tiny -> XLA fallback
    ]
    configs = [
        dict(without_binary=False, scale_tanh=True, binary01=False),
        dict(without_binary=False, scale_tanh=True, binary01=True),
        dict(without_binary=False, scale_tanh=False, binary01=False),
        dict(without_binary=True, scale_tanh=True, binary01=False),
    ]

    ok = True
    for batch, dim, dtype in cases:
        x = jax.random.normal(key, (batch, dim), dtype=jnp.float32).astype(dtype)
        atol = 1e-5 if dtype == jnp.float32 else 2e-2
        for cfg in configs:
            out = latent_code_forward(x, scale, dim=dim, **cfg)
            out = jax.block_until_ready(out)
            ref = _reference(x, scale, dim=dim, **cfg)
            if out.dtype != ref.dtype or out.shape != ref.shape:
                ok = False
                print("DTYPE/SHAPE MISMATCH", batch, dim, dtype, cfg, out.shape, out.dtype)
                continue
            if not jnp.allclose(out.astype(jnp.float32), ref.astype(jnp.float32),
                                atol=atol, rtol=1e-3):
                ok = False
                print("VALUE MISMATCH for", batch, dim, dtype, cfg)

    if ok:
        print("KERNEL_OK")
</pallas_src>

<mosaic_0001>
module attributes {stable_mosaic.version = 11 : i64} {
  func.func @kernel(%arg0: i32, %arg1: memref<1xf32, #tpu.memory_space<smem>>, %arg2: memref<16x4096xf32, #tpu.memory_space<vmem>>, %arg3: memref<16x4096xf32, #tpu.memory_space<vmem>>) attributes {dimension_semantics = [#tpu.dimension_semantics<parallel>], iteration_bounds = array<i64: 2>, scalar_prefetch = 0 : i64, scratch_operands = 0 : i64, tpu.core_type = #tpu.core_type<tc>, window_params = [{transform_indices = @transform_0, window_bounds = array<i64: 1>}, {transform_indices = @transform_1, window_bounds = array<i64: 16, 4096>}, {transform_indices = @transform_2, window_bounds = array<i64: 16, 4096>}]} {
    %c0 = arith.constant 0 : index
    %c0_0 = arith.constant 0 : index
    %0 = vector.load %arg2[%c0, %c0_0] : memref<16x4096xf32, #tpu.memory_space<vmem>>, vector<16x4096xf32>
    %c0_1 = arith.constant 0 : index
    %1 = memref.load %arg1[%c0_1] : memref<1xf32, #tpu.memory_space<smem>>
    %2 = vector.broadcast %1 : f32 to vector<16x4096xf32>
    %3 = arith.mulf %0, %2 : vector<16x4096xf32>
    %4 = math.tanh %3 : vector<16x4096xf32>
    %c0_2 = arith.constant 0 : index
    %c0_3 = arith.constant 0 : index
    %5 = vector.load %arg3[%c0_2, %c0_3] : memref<16x4096xf32, #tpu.memory_space<vmem>>, vector<16x4096xf32>
    tpu.vector_store %arg3[%c0_2, %c0_3], %4 {strides = array<i32>} : memref<16x4096xf32, #tpu.memory_space<vmem>>, vector<16x4096xf32>,
    return
  }
  func.func @transform_0(%arg0: i32) -> i32 {
    %c0_i32 = arith.constant 0 : i32
    %c0_i32_0 = arith.constant 0 : i32
    return %c0_i32 : i32
  }
  func.func @transform_1(%arg0: i32) -> (i32, i32) {
    %c0_i32 = arith.constant 0 : i32
    %c0_i32_0 = arith.constant 0 : i32
    return %arg0, %c0_i32 : i32, i32
  }
  func.func @transform_2(%arg0: i32) -> (i32, i32) {
    %c0_i32 = arith.constant 0 : i32
    %c0_i32_0 = arith.constant 0 : i32
    return %arg0, %c0_i32 : i32, i32
  }
}

</mosaic_0001>

<llo_original>
// kernel: tpu_custom_call.1
$region0: #{tpu_custom_call.1}
  #allocation0 [shape = 'u32[]', space=smem, size = 0x4, offset = 0x4, fixed_abs, tag = 'smem constant byte address 0x4 - core index']
  #allocation1 [shape = 'u32[144,128]{1,0:T(1,128)}', space=vmem, size = 0x12000, scoped, tag = 'internal scratch']
  #allocation2 [shape = 'f32[1]{0:T(128)S(6)}', space=smem, size = 0x200, scoped, tag = 'scoped memory for tpu_custom_call.1']
  %s0 = inlined_call_operand.<no memory space> [shape: f32[1], index: 0, kind: input, shape index: {}]
  %s1 = inlined_call_operand.hbm [shape: f32[32,4096], index: 1, kind: input, shape index: {}]
  %s2 = inlined_call_operand.hbm [shape: f32[32,4096], index: 2, kind: output, shape index: {}]
  %s3 = sld [smem:[#allocation0]]
  $region45: #{tpu_custom_call.1} parent=0
    _
  %s5 = ssub.s32 1, %s3
  %s6 = scalar_select 0, %s5, %s3
  %7 = sst [smem:[#allocation2]] %s0
  $region1: #{tpu_custom_call.1} parent=0
    #allocation3 [shape = 'u8[524288]{0}', space=vmem, size = 0x80000, scoped, tag = 'input window, operand 1']
    #allocation4 [shape = 's32[2]{0}', space=sflag, size = 0x8, scoped, tag = 'scoped memory for tpu_custom_call.1']
    #allocation5 [shape = 's32[2]{0}', space=sflag, size = 0x8, scoped, tag = 'scoped memory for tpu_custom_call.1']
    #allocation6 [shape = 'u8[524288]{0}', space=vmem, size = 0x80000, scoped, tag = 'output window, operand 0']
    %8 = vsyncpa [#allocation4], 0
    %s9 = scalar_lea.sflag [#allocation4], 1
    %10 = vsyncpa %s9, 0
    %11 = vsyncpa [#allocation5], 0
    %s12 = scalar_lea.sflag [#allocation5], 1
    %13 = vsyncpa %s12, 0
    loop: start=0, step=1, limit=4
    $region2: #{tpu_custom_call.1} parent=1 // loop_pre_header
      _
    $region3: #{tpu_custom_call.1} parent=1 // loop_header
      %s15 = sphi 0, %s19
      %p16 = scmp.ge.s32.totalorder %s15, 4
      %s23 = sphi 0, %s23
      %s25 = sphi 0, %s23
      %s26 = sphi 0, %s25
      %s40 = sphi 0, %s26
      %s46 = sphi 0, %s48
      %s49 = sphi 0, %s46
      %s50 = sphi 0, %s49
      %s66 = sphi 0, %s50
      %s72 = sphi 0, %s74
      %s75 = sphi 0, %s72
      %s76 = sphi 0, %s75
      %s92 = sphi 0, %s76
    $region4: #{tpu_custom_call.1} parent=1 // loop_header_branch
      %18 = sbr.rel (%p16) target = $region8
    $region5: #{tpu_custom_call.1} parent=1 // loop_body
      %s20 = ssub.s32 %s15, 1
      %s21 = ssub.s32 %s15, 2
      %s22 = sadd.s32 %s15, 1
      %s24 = sadd.s32 %s23, 1
      %p27 = scmp.eq.s32.totalorder %s15, 1
      %p28 = scmp.ne.s32.totalorder %s23, %s25
      %p29 = scmp.eq.s32.totalorder %s15, 0
      %p30 = por %p28, %p29
      %p31 = scmp.ne.s32.totalorder %s23, %s25
      %p32 = scmp.eq.s32.totalorder %s20, 1
      %p33 = por %p31, %p32
      %p34 = scmp.ne.s32.totalorder %s25, %s26
      %p35 = scmp.eq.s32.totalorder %s20, 0
      %p36 = por %p34, %p35
      %p37 = scmp.ne.s32.totalorder %s25, %s26
      %p38 = scmp.eq.s32.totalorder %s21, 1
      %p39 = por %p37, %p38
      %p41 = scmp.ne.s32.totalorder %s26, %s40
      %p42 = scmp.eq.s32.totalorder %s21, 0
      %p43 = por %p41, %p42
      %s44 = ssub.s32 %s15, %s22
      %p45 = scmp.eq.s32.totalorder %s44, 0
      %s47 = sadd.s32 %s46, 1
      %s48 = scalar_select %p45, %s46, %s47
      %p51 = pneg %p45
      %p52 = scmp.eq.s32.totalorder %s15, 1
      %p53 = por %p51, %p52
      %p54 = scmp.ne.s32.totalorder %s46, %s49
      %p55 = scmp.eq.s32.totalorder %s15, 0
      %p56 = por %p54, %p55
      %p57 = scmp.ne.s32.totalorder %s46, %s49
      %p58 = scmp.eq.s32.totalorder %s20, 1
      %p59 = por %p57, %p58
      %p60 = scmp.ne.s32.totalorder %s49, %s50
      %p61 = scmp.eq.s32.totalorder %s20, 0
      %p62 = por %p60, %p61
      %p63 = scmp.ne.s32.totalorder %s49, %s50
      %p64 = scmp.eq.s32.totalorder %s21, 1
      %p65 = por %p63, %p64
      %p67 = scmp.ne.s32.totalorder %s50, %s66
      %p68 = scmp.eq.s32.totalorder %s21, 0
      %p69 = por %p67, %p68
      %s70 = ssub.s32 %s15, %s22
      %p71 = scmp.eq.s32.totalorder %s70, 0
      %s73 = sadd.s32 %s72, 1
      %s74 = scalar_select %p71, %s72, %s73
      %p77 = pneg %p71
      %p78 = scmp.eq.s32.totalorder %s15, 1
      %p79 = por %p77, %p78
      %p80 = scmp.ne.s32.totalorder %s72, %s75
      %p81 = scmp.eq.s32.totalorder %s15, 0
      %p82 = por %p80, %p81
      %p83 = scmp.ne.s32.totalorder %s72, %s75
      %p84 = scmp.eq.s32.totalorder %s20, 1
      %p85 = por %p83, %p84
      %p86 = scmp.ne.s32.totalorder %s75, %s76
      %p87 = scmp.eq.s32.totalorder %s20, 0
      %p88 = por %p86, %p87
      %p89 = scmp.ne.s32.totalorder %s75, %s76
      %p90 = scmp.eq.s32.totalorder %s21, 1
      %p91 = por %p89, %p90
      %p93 = scmp.ne.s32.totalorder %s76, %s92
      %p94 = scmp.eq.s32.totalorder %s21, 0
      %p95 = por %p93, %p94
      %p96 = scmp.le.s32.totalorder 1, %s15
      %p97 = scmp.lt.s32.totalorder %s15, 3
      %p98 = pnand %p96, %p97
      %p99 = pneg %p98
      // Predicated region
      $region9: #{tpu_custom_call.1} parent=5 // pred_check
        _
      $region10: #{tpu_custom_call.1} parent=5 // pred_check_branch
        %101 = sbr.rel (%p98) target = $region12
      $region11: #{tpu_custom_call.1} parent=5 // pred_region
        %s102 = ssub.s32 %s15, 1
        // Predicated region
        $region13: #{tpu_custom_call.1} parent=11 // pred_check
          %p103 = pneg %p36
        $region14: #{tpu_custom_call.1} parent=11 // pred_check_branch
          %105 = sbr.rel (%p103) target = $region16
        $region15: #{tpu_custom_call.1} parent=11 // pred_region
          _
        $region16: #{tpu_custom_call.1} parent=11 // pred_fallthru
          _
      $region12: #{tpu_custom_call.1} parent=5 // pred_fallthru
        _
      %p106 = scmp.lt.s32.totalorder %s15, 2
      // Predicated region
      $region17: #{tpu_custom_call.1} parent=5 // pred_check
        %p107 = pneg %p106
      $region18: #{tpu_custom_call.1} parent=5 // pred_check_branch
        %109 = sbr.rel (%p107) target = $region20
      $region19: #{tpu_custom_call.1} parent=5 // pred_region
        // Predicated region
        $region21: #{tpu_custom_call.1} parent=19 // pred_check
          %p110 = pneg %p56
        $region22: #{tpu_custom_call.1} parent=19 // pred_check_branch
          %112 = sbr.rel (%p110) target = $region24
        $region23: #{tpu_custom_call.1} parent=19 // pred_region
          %s113 = sand.u32 %s46, 1
          %s114 = scalar_lea.sflag [#allocation4], %s113
          %s115 = sand.u32 %s46, 1
          %s116 = smul.addr %s115, 512
          %s117 = scalar_lea.vmem [#allocation3], %s116
          %s118 = smul.u32 2, %s15
          %s120 = ssub.s32 8192, 8192
          %121 = vsyncadd %s114, %s120
          %s122 = smul.addr %s118, 32
          %s123 = smul.addr %s122, 128
          %s124 = scalar_lea.hbm %s1, %s123
          %s125 = sshll.u32 %s117, 4
          %s126 = int_to_ptr.vmem [resolvable:$true] %s125
          %131 = dma.hbm_to_vmem [thread:$0]  %s124, 8192, %s126, %s114, 4096, 4096, 256
        $region24: #{tpu_custom_call.1} parent=19 // pred_fallthru
          _
      $region20: #{tpu_custom_call.1} parent=5 // pred_fallthru
        _
      %p132 = scmp.le.s32.totalorder 1, %s15
      %p133 = scmp.lt.s32.totalorder %s15, 3
      %p134 = pnand %p132, %p133
      %p135 = pneg %p134
      // Predicated region
      $region25: #{tpu_custom_call.1} parent=5 // pred_check
        _
      $region26: #{tpu_custom_call.1} parent=5 // pred_check_branch
        %137 = sbr.rel (%p134) target = $region28
      $region27: #{tpu_custom_call.1} parent=5 // pred_region
        %s138 = ssub.s32 %s15, 1
        %s139 = sand.u32 %s49, 1
        %s140 = scalar_lea.sflag [#allocation4], %s139
        %s141 = sand.u32 %s49, 1
        %s142 = smul.addr %s141, 512
        %s143 = scalar_lea.vmem [#allocation3], %s142
        // Predicated region
        $region29: #{tpu_custom_call.1} parent=27 // pred_check
          %p144 = pneg %p62
        $region30: #{tpu_custom_call.1} parent=27 // pred_check_branch
          %146 = sbr.rel (%p144) target = $region32
        $region31: #{tpu_custom_call.1} parent=27 // pred_region
          %147 = dma.done %s140, 8192
        $region32: #{tpu_custom_call.1} parent=27 // pred_fallthru
          _
        %p148 = pneg %p36
        %p149 = pneg %p33
        %s150 = sand.u32 %s49, 1
        %s151 = scalar_lea.sflag [#allocation4], %s150
        %s152 = sand.u32 %s49, 1
        %s153 = smul.addr %s152, 512
        %s154 = scalar_lea.vmem [#allocation3], %s153
        %p155 = pneg %p62
        %p156 = pneg %p59
        %p157 = pneg %p88
        %p158 = pneg %p85
        %s159 = sand.u32 %s75, 1
        %s160 = scalar_lea.sflag [#allocation5], %s159
        %s161 = sand.u32 %s75, 1
        %s162 = smul.addr %s161, 512
        %s163 = scalar_lea.vmem [#allocation6], %s162
        %s164 = smul.u32 2, %s20
        %s165 = smul.u32 2, %s20
        %v166 = vld [vmem:[%s143] sm:$0xff]
        %v167 = vld [vmem:[%s143 + $0x8] sm:$0xff]
        %v168 = vld [vmem:[%s143 + $0x10] sm:$0xff]
        %v169 = vld [vmem:[%s143 + $0x18] sm:$0xff]
        %v170 = vld [vmem:[%s143 + $0x20] sm:$0xff]
        %v171 = vld [vmem:[%s143 + $0x28] sm:$0xff]
        %v172 = vld [vmem:[%s143 + $0x30] sm:$0xff]
        %v173 = vld [vmem:[%s143 + $0x38] sm:$0xff]
        %v174 = vld [vmem:[%s143 + $0x40] sm:$0xff]
        %v175 = vld [vmem:[%s143 + $0x48] sm:$0xff]
        %v176 = vld [vmem:[%s143 + $0x50] sm:$0xff]
        %v177 = vld [vmem:[%s143 + $0x58] sm:$0xff]
        %v178 = vld [vmem:[%s143 + $0x60] sm:$0xff]
        %v179 = vld [vmem:[%s143 + $0x68] sm:$0xff]
        %v180 = vld [vmem:[%s143 + $0x70] sm:$0xff]
        %v181 = vld [vmem:[%s143 + $0x78] sm:$0xff]
        %v182 = vld [vmem:[%s143 + $0x80] sm:$0xff]
        %v183 = vld [vmem:[%s143 + $0x88] sm:$0xff]
        %v184 = vld [vmem:[%s143 + $0x90] sm:$0xff]
        %v185 = vld [vmem:[%s143 + $0x98] sm:$0xff]
        %v186 = vld [vmem:[%s143 + $0xa0] sm:$0xff]
        %v187 = vld [vmem:[%s143 + $0xa8] sm:$0xff]
        %v188 = vld [vmem:[%s143 + $0xb0] sm:$0xff]
        %v189 = vld [vmem:[%s143 + $0xb8] sm:$0xff]
        %v190 = vld [vmem:[%s143 + $0xc0] sm:$0xff]
        %v191 = vld [vmem:[%s143 + $0xc8] sm:$0xff]
        %v192 = vld [vmem:[%s143 + $0xd0] sm:$0xff]
        %v193 = vld [vmem:[%s143 + $0xd8] sm:$0xff]
        %v194 = vld [vmem:[%s143 + $0xe0] sm:$0xff]
        %v195 = vld [vmem:[%s143 + $0xe8] sm:$0xff]
        %v196 = vld [vmem:[%s143 + $0xf0] sm:$0xff]
        %v197 = vld [vmem:[%s143 + $0xf8] sm:$0xff]
        %v198 = vld [vmem:[%s143 + $0x100] sm:$0xff]
        %v199 = vld [vmem:[%s143 + $0x108] sm:$0xff]
        %v200 = vld [vmem:[%s143 + $0x110] sm:$0xff]
        %v201 = vld [vmem:[%s143 + $0x118] sm:$0xff]
        %v202 = vld [vmem:[%s143 + $0x120] sm:$0xff]
        %v203 = vld [vmem:[%s143 + $0x128] sm:$0xff]
        %v204 = vld [vmem:[%s143 + $0x130] sm:$0xff]
        %v205 = vld [vmem:[%s143 + $0x138] sm:$0xff]
        %v206 = vld [vmem:[%s143 + $0x140] sm:$0xff]
        %v207 = vld [vmem:[%s143 + $0x148] sm:$0xff]
        %v208 = vld [vmem:[%s143 + $0x150] sm:$0xff]
        %v209 = vld [vmem:[%s143 + $0x158] sm:$0xff]
        %v210 = vld [vmem:[%s143 + $0x160] sm:$0xff]
        %v211 = vld [vmem:[%s143 + $0x168] sm:$0xff]
        %v212 = vld [vmem:[%s143 + $0x170] sm:$0xff]
        %v213 = vld [vmem:[%s143 + $0x178] sm:$0xff]
        %v214 = vld [vmem:[%s143 + $0x180] sm:$0xff]
        %v215 = vld [vmem:[%s143 + $0x188] sm:$0xff]
        %v216 = vld [vmem:[%s143 + $0x190] sm:$0xff]
        %v217 = vld [vmem:[%s143 + $0x198] sm:$0xff]
        %v218 = vld [vmem:[%s143 + $0x1a0] sm:$0xff]
        %v219 = vld [vmem:[%s143 + $0x1a8] sm:$0xff]
        %v220 = vld [vmem:[%s143 + $0x1b0] sm:$0xff]
        %v221 = vld [vmem:[%s143 + $0x1b8] sm:$0xff]
        %v222 = vld [vmem:[%s143 + $0x1c0] sm:$0xff]
        %v223 = vld [vmem:[%s143 + $0x1c8] sm:$0xff]
        %v224 = vld [vmem:[%s143 + $0x1d0] sm:$0xff]
        %v225 = vld [vmem:[%s143 + $0x1d8] sm:$0xff]
        %v226 = vld [vmem:[%s143 + $0x1e0] sm:$0xff]
        %v227 = vld [vmem:[%s143 + $0x1e8] sm:$0xff]
        %v228 = vld [vmem:[%s143 + $0x1f0] sm:$0xff]
        %v229 = vld [vmem:[%s143 + $0x1f8] sm:$0xff]
        %s230 = sld [smem:[#allocation2]]
        %v231 = vstv %s230
        %v232 = vmul.f32 %v166, %v231
        %v233 = vmul.f32 %v167, %v231
        %v234 = vmul.f32 %v168, %v231
        %v235 = vmul.f32 %v169, %v231
        %v236 = vmul.f32 %v170, %v231
        %v237 = vmul.f32 %v171, %v231
        %v238 = vmul.f32 %v172, %v231
        %v239 = vmul.f32 %v173, %v231
        %v240 = vmul.f32 %v174, %v231
        %v241 = vmul.f32 %v175, %v231
        %v242 = vmul.f32 %v176, %v231
        %v243 = vmul.f32 %v177, %v231
        %v244 = vmul.f32 %v178, %v231
        %v245 = vmul.f32 %v179, %v231
        %v246 = vmul.f32 %v180, %v231
        %v247 = vmul.f32 %v181, %v231
        %v248 = vmul.f32 %v182, %v231
        %v249 = vmul.f32 %v183, %v231
        %v250 = vmul.f32 %v184, %v231
        %v251 = vmul.f32 %v185, %v231
        %v252 = vmul.f32 %v186, %v231
        %v253 = vmul.f32 %v187, %v231
        %v254 = vmul.f32 %v188, %v231
        %v255 = vmul.f32 %v189, %v231
        %v256 = vmul.f32 %v190, %v231
        %v257 = vmul.f32 %v191, %v231
        %v258 = vmul.f32 %v192, %v231
        %v259 = vmul.f32 %v193, %v231
        %v260 = vmul.f32 %v194, %v231
        %v261 = vmul.f32 %v195, %v231
        %v262 = vmul.f32 %v196, %v231
        %v263 = vmul.f32 %v197, %v231
        %v264 = vmul.f32 %v198, %v231
        %v265 = vmul.f32 %v199, %v231
        %v266 = vmul.f32 %v200, %v231
        %v267 = vmul.f32 %v201, %v231
        %v268 = vmul.f32 %v202, %v231
        %v269 = vmul.f32 %v203, %v231
        %v270 = vmul.f32 %v204, %v231
        %v271 = vmul.f32 %v205, %v231
        %v272 = vmul.f32 %v206, %v231
        %v273 = vmul.f32 %v207, %v231
        %v274 = vmul.f32 %v208, %v231
        %v275 = vmul.f32 %v209, %v231
        %v276 = vmul.f32 %v210, %v231
        %v277 = vmul.f32 %v211, %v231
        %v278 = vmul.f32 %v212, %v231
        %v279 = vmul.f32 %v213, %v231
        %v280 = vmul.f32 %v214, %v231
        %v281 = vmul.f32 %v215, %v231
        %v282 = vmul.f32 %v216, %v231
        %v283 = vmul.f32 %v217, %v231
        %v284 = vmul.f32 %v218, %v231
        %v285 = vmul.f32 %v219, %v231
        %v286 = vmul.f32 %v220, %v231
        %v287 = vmul.f32 %v221, %v231
        %v288 = vmul.f32 %v222, %v231
        %v289 = vmul.f32 %v223, %v231
        %v290 = vmul.f32 %v224, %v231
        %v291 = vmul.f32 %v225, %v231
        %v292 = vmul.f32 %v226, %v231
        %v293 = vmul.f32 %v227, %v231
        %v294 = vmul.f32 %v228, %v231
        %v295 = vmul.f32 %v229, %v231
        %v296 = vtanh.pop %v232
        %v297 = vtanh.pop %v233
        %v298 = vtanh.pop %v234
        %v299 = vtanh.pop %v235
        %v300 = vtanh.pop %v236
        %v301 = vtanh.pop %v237
        %v302 = vtanh.pop %v238
        %v303 = vtanh.pop %v239
        %v304 = vtanh.pop %v240
        %v305 = vtanh.pop %v241
        %v306 = vtanh.pop %v242
        %v307 = vtanh.pop %v243
        %v308 = vtanh.pop %v244
        %v309 = vtanh.pop %v245
        %v310 = vtanh.pop %v246
        %v311 = vtanh.pop %v247
        %v312 = vtanh.pop %v248
        %v313 = vtanh.pop %v249
        %v314 = vtanh.pop %v250
        %v315 = vtanh.pop %v251
        %v316 = vtanh.pop %v252
        %v317 = vtanh.pop %v253
        %v318 = vtanh.pop %v254
        %v319 = vtanh.pop %v255
        %v320 = vtanh.pop %v256
        %v321 = vtanh.pop %v257
        %v322 = vtanh.pop %v258
        %v323 = vtanh.pop %v259
        %v324 = vtanh.pop %v260
        %v325 = vtanh.pop %v261
        %v326 = vtanh.pop %v262
        %v327 = vtanh.pop %v263
        %v328 = vtanh.pop %v264
        %v329 = vtanh.pop %v265
        %v330 = vtanh.pop %v266
        %v331 = vtanh.pop %v267
        %v332 = vtanh.pop %v268
        %v333 = vtanh.pop %v269
        %v334 = vtanh.pop %v270
        %v335 = vtanh.pop %v271
        %v336 = vtanh.pop %v272
        %v337 = vtanh.pop %v273
        %v338 = vtanh.pop %v274
        %v339 = vtanh.pop %v275
        %v340 = vtanh.pop %v276
        %v341 = vtanh.pop %v277
        %v342 = vtanh.pop %v278
        %v343 = vtanh.pop %v279
        %v344 = vtanh.pop %v280
        %v345 = vtanh.pop %v281
        %v346 = vtanh.pop %v282
        %v347 = vtanh.pop %v283
        %v348 = vtanh.pop %v284
        %v349 = vtanh.pop %v285
        %v350 = vtanh.pop %v286
        %v351 = vtanh.pop %v287
        %v352 = vtanh.pop %v288
        %v353 = vtanh.pop %v289
        %v354 = vtanh.pop %v290
        %v355 = vtanh.pop %v291
        %v356 = vtanh.pop %v292
        %v357 = vtanh.pop %v293
        %v358 = vtanh.pop %v294
        %v359 = vtanh.pop %v295
        %360 = vst [vmem:[%s163] sm:$0xff] %v296
        %361 = vst [vmem:[%s163 + $0x8] sm:$0xff] %v297
        %362 = vst [vmem:[%s163 + $0x10] sm:$0xff] %v298
        %363 = vst [vmem:[%s163 + $0x18] sm:$0xff] %v299
        %364 = vst [vmem:[%s163 + $0x20] sm:$0xff] %v300
        %365 = vst [vmem:[%s163 + $0x28] sm:$0xff] %v301
        %366 = vst [vmem:[%s163 + $0x30] sm:$0xff] %v302
        %367 = vst [vmem:[%s163 + $0x38] sm:$0xff] %v303
        %368 = vst [vmem:[%s163 + $0x40] sm:$0xff] %v304
        %369 = vst [vmem:[%s163 + $0x48] sm:$0xff] %v305
        %370 = vst [vmem:[%s163 + $0x50] sm:$0xff] %v306
        %371 = vst [vmem:[%s163 + $0x58] sm:$0xff] %v307
        %372 = vst [vmem:[%s163 + $0x60] sm:$0xff] %v308
        %373 = vst [vmem:[%s163 + $0x68] sm:$0xff] %v309
        %374 = vst [vmem:[%s163 + $0x70] sm:$0xff] %v310
        %375 = vst [vmem:[%s163 + $0x78] sm:$0xff] %v311
        %376 = vst [vmem:[%s163 + $0x80] sm:$0xff] %v312
        %377 = vst [vmem:[%s163 + $0x88] sm:$0xff] %v313
        %378 = vst [vmem:[%s163 + $0x90] sm:$0xff] %v314
        %379 = vst [vmem:[%s163 + $0x98] sm:$0xff] %v315
        %380 = vst [vmem:[%s163 + $0xa0] sm:$0xff] %v316
        %381 = vst [vmem:[%s163 + $0xa8] sm:$0xff] %v317
        %382 = vst [vmem:[%s163 + $0xb0] sm:$0xff] %v318
        %383 = vst [vmem:[%s163 + $0xb8] sm:$0xff] %v319
        %384 = vst [vmem:[%s163 + $0xc0] sm:$0xff] %v320
        %385 = vst [vmem:[%s163 + $0xc8] sm:$0xff] %v321
        %386 = vst [vmem:[%s163 + $0xd0] sm:$0xff] %v322
        %387 = vst [vmem:[%s163 + $0xd8] sm:$0xff] %v323
        %388 = vst [vmem:[%s163 + $0xe0] sm:$0xff] %v324
        %389 = vst [vmem:[%s163 + $0xe8] sm:$0xff] %v325
        %390 = vst [vmem:[%s163 + $0xf0] sm:$0xff] %v326
        %391 = vst [vmem:[%s163 + $0xf8] sm:$0xff] %v327
        %392 = vst [vmem:[%s163 + $0x100] sm:$0xff] %v328
        %393 = vst [vmem:[%s163 + $0x108] sm:$0xff] %v329
        %394 = vst [vmem:[%s163 + $0x110] sm:$0xff] %v330
        %395 = vst [vmem:[%s163 + $0x118] sm:$0xff] %v331
        %396 = vst [vmem:[%s163 + $0x120] sm:$0xff] %v332
        %397 = vst [vmem:[%s163 + $0x128] sm:$0xff] %v333
        %398 = vst [vmem:[%s163 + $0x130] sm:$0xff] %v334
        %399 = vst [vmem:[%s163 + $0x138] sm:$0xff] %v335
        %400 = vst [vmem:[%s163 + $0x140] sm:$0xff] %v336
        %401 = vst [vmem:[%s163 + $0x148] sm:$0xff] %v337
        %402 = vst [vmem:[%s163 + $0x150] sm:$0xff] %v338
        %403 = vst [vmem:[%s163 + $0x158] sm:$0xff] %v339
        %404 = vst [vmem:[%s163 + $0x160] sm:$0xff] %v340
        %405 = vst [vmem:[%s163 + $0x168] sm:$0xff] %v341
        %406 = vst [vmem:[%s163 + $0x170] sm:$0xff] %v342
        %407 = vst [vmem:[%s163 + $0x178] sm:$0xff] %v343
        %408 = vst [vmem:[%s163 + $0x180] sm:$0xff] %v344
        %409 = vst [vmem:[%s163 + $0x188] sm:$0xff] %v345
        %410 = vst [vmem:[%s163 + $0x190] sm:$0xff] %v346
        %411 = vst [vmem:[%s163 + $0x198] sm:$0xff] %v347
        %412 = vst [vmem:[%s163 + $0x1a0] sm:$0xff] %v348
        %413 = vst [vmem:[%s163 + $0x1a8] sm:$0xff] %v349
        %414 = vst [vmem:[%s163 + $0x1b0] sm:$0xff] %v350
        %415 = vst [vmem:[%s163 + $0x1b8] sm:$0xff] %v351
        %416 = vst [vmem:[%s163 + $0x1c0] sm:$0xff] %v352
        %417 = vst [vmem:[%s163 + $0x1c8] sm:$0xff] %v353
        %418 = vst [vmem:[%s163 + $0x1d0] sm:$0xff] %v354
        %419 = vst [vmem:[%s163 + $0x1d8] sm:$0xff] %v355
        %420 = vst [vmem:[%s163 + $0x1e0] sm:$0xff] %v356
        %421 = vst [vmem:[%s163 + $0x1e8] sm:$0xff] %v357
        %422 = vst [vmem:[%s163 + $0x1f0] sm:$0xff] %v358
        %423 = vst [vmem:[%s163 + $0x1f8] sm:$0xff] %v359
        %s424 = sand.u32 %s75, 1
        %s425 = scalar_lea.sflag [#allocation5], %s424
        %s426 = sand.u32 %s75, 1
        %s427 = smul.addr %s426, 512
        %s428 = scalar_lea.vmem [#allocation6], %s427
        // Predicated region
        $region33: #{tpu_custom_call.1} parent=27 // pred_check
          %p429 = pneg %p85
        $region34: #{tpu_custom_call.1} parent=27 // pred_check_branch
          %431 = sbr.rel (%p429) target = $region36
        $region35: #{tpu_custom_call.1} parent=27 // pred_region
          %s432 = smul.u32 2, %s20
          %s434 = ssub.s32 8192, 8192
          %435 = vsyncadd %s425, %s434
          %s436 = smul.addr %s432, 32
          %s437 = smul.addr %s436, 128
          %s438 = scalar_lea.hbm %s2, %s437
          %s439 = sshll.u32 %s428, 4
          %s440 = int_to_ptr.vmem [resolvable:$true] %s439
          %445 = dma.vmem_to_hbm [thread:$0]  %s440, 8192, %s438, %s425, 4096, 4096, 256
        $region36: #{tpu_custom_call.1} parent=27 // pred_fallthru
          _
      $region28: #{tpu_custom_call.1} parent=5 // pred_fallthru
        _
      %p446 = scmp.le.s32.totalorder 2, %s15
      // Predicated region
      $region37: #{tpu_custom_call.1} parent=5 // pred_check
        %p447 = pneg %p446
      $region38: #{tpu_custom_call.1} parent=5 // pred_check_branch
        %449 = sbr.rel (%p447) target = $region40
      $region39: #{tpu_custom_call.1} parent=5 // pred_region
        %s450 = ssub.s32 %s15, 2
        // Predicated region
        $region41: #{tpu_custom_call.1} parent=39 // pred_check
          %p451 = pneg %p91
        $region42: #{tpu_custom_call.1} parent=39 // pred_check_branch
          %453 = sbr.rel (%p451) target = $region44
        $region43: #{tpu_custom_call.1} parent=39 // pred_region
          %s454 = sand.u32 %s76, 1
          %s455 = scalar_lea.sflag [#allocation5], %s454
          %s456 = sand.u32 %s76, 1
          %s457 = smul.addr %s456, 512
          %s458 = scalar_lea.vmem [#allocation6], %s457
          %459 = dma.done %s455, 8192
        $region44: #{tpu_custom_call.1} parent=39 // pred_fallthru
          _
      $region40: #{tpu_custom_call.1} parent=5 // pred_fallthru
        _
    $region6: #{tpu_custom_call.1} parent=1 // loop_footer
      %s19 = sadd.s32 1, %s15
    $region7: #{tpu_custom_call.1} parent=1 // loop_footer_branch
      %14 = sbr.rel target = $region3
    $region8: #{tpu_custom_call.1} parent=1 // loop_exit
      _
    %460 = vsyncpa [#allocation4], 1
    %s461 = scalar_lea.sflag [#allocation4], 1
    %462 = vsyncpa %s461, 1
    %463 = vsyncpa [#allocation5], 1
    %s464 = scalar_lea.sflag [#allocation5], 1
    %465 = vsyncpa %s464, 1

</llo_original>
